<compile_context>
chip_gen: v7x
topology: tpu7x:2x2x1
jax: 0.10.0
libtpu: 0.0.40
codegen_flags: <defaults>
</compile_context>

<pallas_src>
import math

import jax
import jax.numpy as jnp
from jax.experimental import pallas as pl
from jax.experimental.pallas import tpu as pltpu

LN_EPS = 1e-5  # torch.nn.LayerNorm default eps


# ----------------------------------------------------------------------------
# Chip introspection (tile-size heuristics only; every path has a safe fallback).
# ----------------------------------------------------------------------------
def _device_kind():
    try:
        return jax.devices()[0].device_kind.lower()
    except Exception:
        return ""


def _num_tensorcores_per_chip():
    """>1 only where the 'parallel' grid axis can shard across TensorCores
    (v7x, megacore v4/v5p); defaults to 1 (v5e/v6e) so we never split for nothing."""
    try:
        info = pltpu.get_tpu_info()
        for attr in ("num_cores", "num_tensorcores", "tensorcores_per_chip", "cores_per_chip"):
            v = getattr(info, attr, None)
            if isinstance(v, int) and v > 1:
                return v
    except Exception:
        pass
    kind = _device_kind()
    if any(t in kind for t in ("v7", "v4", "v5p")):
        return 2
    return 1


def _row_tile_cap():
    kind = _device_kind()
    # v5e: only 1 vector-store slot and the post-matmul (tm,128) f32 tile should stay
    # inside the vreg file, so cap tm nearer 256 there; 512 elsewhere (~85% of HBM
    # roofline in measured Pallas sweeps, working set well under default scoped VMEM).
    if "v5 lite" in kind or "v5e" in kind or "v5litepod" in kind:
        return 256
    return 512


# ----------------------------------------------------------------------------
# Wrapper-side layout plumbing (no arithmetic): im2col + operand packing.
# ----------------------------------------------------------------------------
def _im2col(x, k, s, pad):
    """NCHW x -> (B*Ho*Wo, Cin*k*k) patch matrix, contraction ordered (Cin, kh, kw)
    to match torch Conv2d weight.reshape(Cout, -1)."""
    B, Cin, H, W = x.shape
    xp = jnp.pad(x, ((0, 0), (0, 0), (pad, pad), (pad, pad)))
    Ho = (H + 2 * pad - k) // s + 1
    Wo = (W + 2 * pad - k) // s + 1
    taps = []
    for dy in range(k):
        for dx in range(k):
            taps.append(xp[:, :, dy:dy + s * Ho:s, dx:dx + s * Wo:s])  # (B, Cin, Ho, Wo)
    p = jnp.stack(taps, axis=2)                      # (B, Cin, k*k, Ho, Wo)
    p = p.reshape(B, Cin * k * k, Ho * Wo)           # K order = (Cin, kh, kw)
    p = p.transpose(0, 2, 1).reshape(B * Ho * Wo, Cin * k * k)
    return p, Ho, Wo


def _prepare_operands(x, conv_w, *, patch_size, stride):
    """Shared by the Pallas wrapper and the same-numerics reference:
    im2col, minimal K zero-padding, bf16 cast for the MXU."""
    Cout = conv_w.shape[0]
    pad = patch_size // 2
    patches, Ho, Wo = _im2col(x, patch_size, stride, pad)        # (M, K) f32
    K = patches.shape[1]
    # K is always a full-extent block (never tiled), so no 128-multiple requirement;
    # a 32-multiple keeps the bf16 weight sublane dim tile-aligned while minimizing
    # the padded HBM stream (147 -> 160 instead of 256).
    Kp = ((K + 31) // 32) * 32
    w_flat = conv_w.reshape(Cout, K).T                           # (K, Cout)
    patches = jnp.pad(patches, ((0, 0), (0, Kp - K))).astype(jnp.bfloat16)
    w_flat = jnp.pad(w_flat, ((0, Kp - K), (0, 0))).astype(jnp.bfloat16)
    return patches, w_flat, Ho, Wo


# ----------------------------------------------------------------------------
# Pallas kernel: projection matmul (bf16 in / f32 acc) + bias + LayerNorm, fused.
# ----------------------------------------------------------------------------
def _patch_embed_kernel(p_ref, w_ref, par_ref, o_ref):
    # (tm, Kp) bf16 @ (Kp, C) bf16 -> f32 accumulate on the MXU.
    y = jnp.dot(p_ref[...], w_ref[...], preferred_element_type=jnp.float32)
    par = par_ref[...]                                  # (8, C) f32; rows 0..2 used
    y = y + par[0:1, :]                                 # conv bias (f32 VPU from here)
    mean = jnp.mean(y, axis=-1, keepdims=True)
    var = jnp.mean(jnp.square(y - mean), axis=-1, keepdims=True)
    y = (y - mean) * jax.lax.rsqrt(var + LN_EPS)
    o_ref[...] = (y * par[1:2, :] + par[2:3, :]).astype(o_ref.dtype)


def _choose_row_tile(M, *, cap, num_cores):
    """Largest multiple-of-8 row tile dividing M, capped; on multi-TensorCore chips
    shrink (along divisors) until the grid has >= num_cores steps so the 'parallel'
    axis shards.  Single-TC chips keep the biggest tile (grid is a serial loop)."""
    best = None
    for t in range(8, min(M, cap) + 1, 8):
        if M % t == 0:
            best = t
    if best is None:
        return M                       # ragged M: one full-extent block is still legal
    while num_cores > 1 and M // best < num_cores:
        shrunk = None
        for t in range(8, best, 8):    # largest proper divisor of best (also divides M)
            if best % t == 0:
                shrunk = t
        if shrunk is None:
            break
        best = shrunk
    return best


def overlap_patch_embed(x, conv_w, conv_b, ln_w, ln_b, *, patch_size, stride,
                        out_dtype=jnp.float32):
    """x: (B, Cin, H, W) f32.  Returns (tokens (B, N, C) out_dtype, H', W')."""
    B = x.shape[0]
    Cout = conv_w.shape[0]
    patches, w_flat, Ho, Wo = _prepare_operands(x, conv_w, patch_size=patch_size, stride=stride)
    M, Kp = patches.shape
    tm = _choose_row_tile(M, cap=_row_tile_cap(), num_cores=_num_tensorcores_per_chip())

    # conv bias / LN weight / LN bias packed into one sublane-aligned (8, C) operand.
    params = jnp.zeros((8, Cout), jnp.float32)
    params = params.at[0].set(conv_b.astype(jnp.float32))
    params = params.at[1].set(ln_w.astype(jnp.float32))
    params = params.at[2].set(ln_b.astype(jnp.float32))

    out = pl.pallas_call(
        _patch_embed_kernel,
        grid=(M // tm,),
        in_specs=[
            pl.BlockSpec((tm, Kp), lambda i: (i, 0)),      # im2col patches (bf16)
            pl.BlockSpec((Kp, Cout), lambda i: (0, 0)),    # projection weight (bf16)
            pl.BlockSpec((8, Cout), lambda i: (0, 0)),     # packed bias + LN affine (f32)
        ],
        out_specs=pl.BlockSpec((tm, Cout), lambda i: (i, 0)),
        out_shape=jax.ShapeDtypeStruct((M, Cout), out_dtype),
        compiler_params=pltpu.CompilerParams(dimension_semantics=("parallel",)),
    )(patches, w_flat, params)

    return out.reshape(B, Ho * Wo, Cout), Ho, Wo


# ----------------------------------------------------------------------------
# Pure-JAX references.
# ----------------------------------------------------------------------------
def _layernorm(y, w, b):
    mean = jnp.mean(y, axis=-1, keepdims=True)
    var = jnp.mean(jnp.square(y - mean), axis=-1, keepdims=True)
    return (y - mean) * jax.lax.rsqrt(var + LN_EPS) * w + b


def ref_overlap_patch_embed_f32(x, conv_w, conv_b, ln_w, ln_b, *, patch_size, stride):
    """f32 reference with exact torch.nn semantics (Conv2d -> flatten/transpose -> LayerNorm)."""
    pad = patch_size // 2
    y = jax.lax.conv_general_dilated(
        x, conv_w, window_strides=(stride, stride),
        padding=[(pad, pad), (pad, pad)],
        dimension_numbers=("NCHW", "OIHW", "NCHW"),
        precision=jax.lax.Precision.HIGHEST)
    y = y + conv_b[None, :, None, None]
    B, C, Ho, Wo = y.shape
    y = y.reshape(B, C, Ho * Wo).transpose(0, 2, 1)
    return _layernorm(y, ln_w, ln_b), Ho, Wo


def ref_overlap_patch_embed_same_numerics(x, conv_w, conv_b, ln_w, ln_b, *, patch_size, stride):
    """Same bf16-operand / f32-accumulate math path as the kernel (tight check)."""
    B = x.shape[0]
    Cout = conv_w.shape[0]
    patches, w_flat, Ho, Wo = _prepare_operands(x, conv_w, patch_size=patch_size, stride=stride)
    y = jnp.dot(patches.astype(jnp.float32), w_flat.astype(jnp.float32),
                precision=jax.lax.Precision.HIGHEST) + conv_b[None, :]
    y = _layernorm(y, ln_w[None, :], ln_b[None, :])
    return y.reshape(B, Ho * Wo, Cout), Ho, Wo


if __name__ == "__main__":
    # Small config consistent with the module: 32x32 RGB image, patch_size=7,
    # stride=4 (module defaults), embed_dim=128 (lane-dense) -> H'=W'=8, N=64,
    # M = B*N = 128 rows folded into one dense matmul over a short parallel grid.
    B, Cin, H, W = 2, 3, 32, 32
    patch_size, stride, embed_dim = 7, 4, 128

    key = jax.random.PRNGKey(0)
    kx, kw, kb, klw, klb = jax.random.split(key, 5)

    # Conv2d init from _init_weights: normal(0, sqrt(2/fan_out)).  The module
    # zero-inits conv bias / unit-inits LayerNorm; small random values are used
    # here instead so the bias and affine-LN paths are actually exercised.
    fan_out = patch_size * patch_size * embed_dim
    conv_w = math.sqrt(2.0 / fan_out) * jax.random.normal(
        kw, (embed_dim, Cin, patch_size, patch_size), jnp.float32)
    conv_b = 0.02 * jax.random.normal(kb, (embed_dim,), jnp.float32)
    ln_w = 1.0 + 0.05 * jax.random.normal(klw, (embed_dim,), jnp.float32)
    ln_b = 0.05 * jax.random.normal(klb, (embed_dim,), jnp.float32)

    x = jax.random.normal(kx, (B, Cin, H, W), jnp.float32)

    out, Ho, Wo = overlap_patch_embed(x, conv_w, conv_b, ln_w, ln_b,
                                      patch_size=patch_size, stride=stride)
    jax.block_until_ready(out)

    exp_hw = (H + 2 * (patch_size // 2) - patch_size) // stride + 1
    assert (Ho, Wo) == (exp_hw, exp_hw)
    assert out.shape == (B, Ho * Wo, embed_dim) and out.dtype == jnp.float32

    # Tight check: identical bf16-operand / f32-accumulate math path (proves the
    # kernel computes exactly what it should, independent of bf16 quantization).
    ref_same, _, _ = ref_overlap_patch_embed_same_numerics(
        x, conv_w, conv_b, ln_w, ln_b, patch_size=patch_size, stride=stride)
    err_same = float(jnp.max(jnp.abs(out - ref_same)))
    assert jnp.allclose(out, ref_same, rtol=1e-3, atol=1e-3), err_same

    # Torch-semantics f32 reference; tolerance only covers bf16 quantization of
    # the MXU operands (accumulation and all elementwise math stay f32).
    ref_f32, rHo, rWo = ref_overlap_patch_embed_f32(
        x, conv_w, conv_b, ln_w, ln_b, patch_size=patch_size, stride=stride)
    assert (Ho, Wo) == (rHo, rWo)
    err_f32 = float(jnp.max(jnp.abs(out - ref_f32)))
    assert jnp.allclose(out, ref_f32, rtol=3e-2, atol=3e-2), err_f32

    # bf16 writeback path (the bandwidth-saving option for downstream bf16 models).
    out_bf16, _, _ = overlap_patch_embed(x, conv_w, conv_b, ln_w, ln_b,
                                         patch_size=patch_size, stride=stride,
                                         out_dtype=jnp.bfloat16)
    jax.block_until_ready(out_bf16)
    assert out_bf16.dtype == jnp.bfloat16 and out_bf16.shape == out.shape
    assert jnp.allclose(out_bf16.astype(jnp.float32), out, rtol=5e-2, atol=5e-2)

    print("KERNEL_OK")
</pallas_src>

<mosaic_0001>
module attributes {stable_mosaic.version = 11 : i64} {
  func.func @_patch_embed_kernel(%arg0: i32, %arg1: memref<128x160xbf16, #tpu.memory_space<vmem>>, %arg2: memref<160x128xbf16, #tpu.memory_space<vmem>>, %arg3: memref<8x128xf32, #tpu.memory_space<vmem>>, %arg4: memref<128x128xf32, #tpu.memory_space<vmem>>) attributes {dimension_semantics = [#tpu.dimension_semantics<parallel>], iteration_bounds = array<i64: 1>, scalar_prefetch = 0 : i64, scratch_operands = 0 : i64, tpu.core_type = #tpu.core_type<tc>, window_params = [{transform_indices = @transform_0, window_bounds = array<i64: 128, 160>}, {pipeline_mode = #tpu.pipeline_mode<synchronous>, transform_indices = @transform_1, window_bounds = array<i64: 160, 128>}, {pipeline_mode = #tpu.pipeline_mode<synchronous>, transform_indices = @transform_2, window_bounds = array<i64: 8, 128>}, {transform_indices = @transform_3, window_bounds = array<i64: 128, 128>}]} {
    %c0 = arith.constant 0 : index
    %c0_0 = arith.constant 0 : index
    %0 = vector.load %arg1[%c0, %c0_0] : memref<128x160xbf16, #tpu.memory_space<vmem>>, vector<128x160xbf16>
    %c0_1 = arith.constant 0 : index
    %c0_2 = arith.constant 0 : index
    %1 = vector.load %arg2[%c0_1, %c0_2] : memref<160x128xbf16, #tpu.memory_space<vmem>>, vector<160x128xbf16>
    %cst = arith.constant dense<0.000000e+00> : vector<128x128xf32>
    %2 = tpu.matmul %0, %1, %cst {dimension_numbers = #tpu.dot_dimension_numbers<[1], [0], [0], [1], [0, 0, 1, 1], [], []>} : vector<128x160xbf16>, vector<160x128xbf16>, vector<128x128xf32> -> vector<128x128xf32>
    %c0_3 = arith.constant 0 : index
    %c0_4 = arith.constant 0 : index
    %3 = vector.load %arg3[%c0_3, %c0_4] : memref<8x128xf32, #tpu.memory_space<vmem>>, vector<8x128xf32>
    %4 = vector.extract_strided_slice %3 {offsets = [0, 0], sizes = [1, 128], strides = [1, 1]} : vector<8x128xf32> to vector<1x128xf32>
    %5 = vector.broadcast %4 : vector<1x128xf32> to vector<128x128xf32>
    %6 = arith.addf %2, %5 : vector<128x128xf32>
    %cst_5 = arith.constant dense<0.000000e+00> : vector<128xf32>
    %7 = vector.multi_reduction <add>, %6, %cst_5 [1] : vector<128x128xf32> to vector<128xf32>
    %8 = vector.shape_cast %7 : vector<128xf32> to vector<128x1xf32>
    %cst_6 = arith.constant 1.280000e+02 : f32
    %9 = vector.broadcast %cst_6 : f32 to vector<128x1xf32>
    %10 = arith.divf %8, %9 : vector<128x1xf32>
    %11 = vector.broadcast %10 : vector<128x1xf32> to vector<128x128xf32>
    %12 = arith.subf %6, %11 : vector<128x128xf32>
    %13 = arith.mulf %12, %12 : vector<128x128xf32>
    %cst_7 = arith.constant dense<0.000000e+00> : vector<128xf32>
    %14 = vector.multi_reduction <add>, %13, %cst_7 [1] : vector<128x128xf32> to vector<128xf32>
    %15 = vector.shape_cast %14 : vector<128xf32> to vector<128x1xf32>
    %cst_8 = arith.constant 1.280000e+02 : f32
    %16 = vector.broadcast %cst_8 : f32 to vector<128x1xf32>
    %17 = arith.divf %15, %16 : vector<128x1xf32>
    %18 = vector.broadcast %10 : vector<128x1xf32> to vector<128x128xf32>
    %19 = arith.subf %6, %18 : vector<128x128xf32>
    %cst_9 = arith.constant 9.99999974E-6 : f32
    %20 = vector.broadcast %cst_9 : f32 to vector<128x1xf32>
    %21 = arith.addf %17, %20 : vector<128x1xf32>
    %22 = math.rsqrt %21 : vector<128x1xf32>
    %23 = vector.broadcast %22 : vector<128x1xf32> to vector<128x128xf32>
    %24 = arith.mulf %19, %23 : vector<128x128xf32>
    %25 = vector.extract_strided_slice %3 {offsets = [1, 0], sizes = [1, 128], strides = [1, 1]} : vector<8x128xf32> to vector<1x128xf32>
    %26 = vector.broadcast %25 : vector<1x128xf32> to vector<128x128xf32>
    %27 = arith.mulf %24, %26 : vector<128x128xf32>
    %28 = vector.extract_strided_slice %3 {offsets = [2, 0], sizes = [1, 128], strides = [1, 1]} : vector<8x128xf32> to vector<1x128xf32>
    %29 = vector.broadcast %28 : vector<1x128xf32> to vector<128x128xf32>
    %30 = arith.addf %27, %29 : vector<128x128xf32>
    %c0_10 = arith.constant 0 : index
    %c0_11 = arith.constant 0 : index
    %31 = vector.load %arg4[%c0_10, %c0_11] : memref<128x128xf32, #tpu.memory_space<vmem>>, vector<128x128xf32>
    tpu.vector_store %arg4[%c0_10, %c0_11], %30 {strides = array<i32>} : memref<128x128xf32, #tpu.memory_space<vmem>>, vector<128x128xf32>,
    return
  }
  func.func @transform_0(%arg0: i32) -> (i32, i32) {
    %c0_i32 = arith.constant 0 : i32
    %c0_i32_0 = arith.constant 0 : i32
    return %arg0, %c0_i32 : i32, i32
  }
  func.func @transform_1(%arg0: i32) -> (i32, i32) {
    %c0_i32 = arith.constant 0 : i32
    %c0_i32_0 = arith.constant 0 : i32
    %c0_i32_1 = arith.constant 0 : i32
    return %c0_i32, %c0_i32_0 : i32, i32
  }
  func.func @transform_2(%arg0: i32) -> (i32, i32) {
    %c0_i32 = arith.constant 0 : i32
    %c0_i32_0 = arith.constant 0 : i32
    %c0_i32_1 = arith.constant 0 : i32
    return %c0_i32, %c0_i32_0 : i32, i32
  }
  func.func @transform_3(%arg0: i32) -> (i32, i32) {
    %c0_i32 = arith.constant 0 : i32
    %c0_i32_0 = arith.constant 0 : i32
    return %arg0, %c0_i32 : i32, i32
  }
}

</mosaic_0001>

<llo_original>
// kernel: tpu_custom_call.1
$region0: #{tpu_custom_call.1}
  #allocation0 [shape = 'u32[]', space=smem, size = 0x4, offset = 0x4, fixed_abs, tag = 'smem constant byte address 0x4 - core index']
  #allocation1 [shape = 'u32[144,128]{1,0:T(1,128)}', space=vmem, size = 0x12000, scoped, tag = 'internal scratch']
  %s0 = inlined_call_operand.vmem [shape: bf16[128,160], index: 0, kind: input, shape index: {}]
  %s1 = inlined_call_operand.vmem [shape: bf16[160,128], index: 1, kind: input, shape index: {}]
  %s2 = inlined_call_operand.vmem [shape: f32[8,128], index: 2, kind: input, shape index: {}]
  %s3 = inlined_call_operand.hbm [shape: f32[128,128], index: 3, kind: output, shape index: {}]
  %s4 = sld [smem:[#allocation0]]
  $region22: #{tpu_custom_call.1} parent=0
    _
  %s6 = ssub.s32 1, %s4
  %s7 = scalar_select 0, %s6, %s4
  $region1: #{tpu_custom_call.1} parent=0
    #allocation2 [shape = 'u8[65536]{0}', space=vmem, size = 0x10000, scoped, tag = 'output window, operand 0, single buffered']
    #allocation3 [shape = 's32[1]{0}', space=sflag, size = 0x4, scoped, tag = 'scoped memory for tpu_custom_call.1']
    %8 = vsyncpa [#allocation3], 0
    // Predicated region
    $region2: #{tpu_custom_call.1} parent=1 // pred_check
      _
    $region3: #{tpu_custom_call.1} parent=1 // pred_check_branch
      %10 = sbr.rel (0) target = $region5
    $region4: #{tpu_custom_call.1} parent=1 // pred_region
      _
    $region5: #{tpu_custom_call.1} parent=1 // pred_fallthru
      _
    // Predicated region
    $region6: #{tpu_custom_call.1} parent=1 // pred_check
      _
    $region7: #{tpu_custom_call.1} parent=1 // pred_check_branch
      %12 = sbr.rel (0) target = $region9
    $region8: #{tpu_custom_call.1} parent=1 // pred_region
      _
    $region9: #{tpu_custom_call.1} parent=1 // pred_fallthru
      _
    // Predicated region
    $region10: #{tpu_custom_call.1} parent=1 // pred_check
      _
    $region11: #{tpu_custom_call.1} parent=1 // pred_check_branch
      %14 = sbr.rel (0) target = $region13
    $region12: #{tpu_custom_call.1} parent=1 // pred_region
      _
    $region13: #{tpu_custom_call.1} parent=1 // pred_fallthru
      _
    %v16 = vld [vmem:[%s0] sm:$0xff]
    %v17 = vld [vmem:[%s0 + $0x8] sm:$0xff]
    %v18 = vld [vmem:[%s0 + $0x10] sm:$0xff]
    %v19 = vld [vmem:[%s0 + $0x18] sm:$0xff]
    %v20 = vld [vmem:[%s0 + $0x20] sm:$0xff]
    %v21 = vld [vmem:[%s0 + $0x28] sm:$0xff]
    %v22 = vld [vmem:[%s0 + $0x30] sm:$0xff]
    %v23 = vld [vmem:[%s0 + $0x38] sm:$0xff]
    %v24 = vld [vmem:[%s0 + $0x40] sm:$0xff]
    %v25 = vld [vmem:[%s0 + $0x48] sm:$0xff]
    %v26 = vld [vmem:[%s0 + $0x50] sm:$0xff]
    %v27 = vld [vmem:[%s0 + $0x58] sm:$0xff]
    %v28 = vld [vmem:[%s0 + $0x60] sm:$0xff]
    %v29 = vld [vmem:[%s0 + $0x68] sm:$0xff]
    %v30 = vld [vmem:[%s0 + $0x70] sm:$0xff]
    %v31 = vld [vmem:[%s0 + $0x78] sm:$0xff]
    %v32 = vld [vmem:[%s1] sm:$0xf]
    %v33 = vld [vmem:[%s1 + $0x4] sm:$0xf]
    %v34 = vld [vmem:[%s1 + $0x8] sm:$0xf]
    %v35 = vld [vmem:[%s1 + $0xc] sm:$0xf]
    %v36 = vld [vmem:[%s1 + $0x10] sm:$0xf]
    %v37 = vld [vmem:[%s1 + $0x14] sm:$0xf]
    %v38 = vld [vmem:[%s1 + $0x18] sm:$0xf]
    %v39 = vld [vmem:[%s1 + $0x1c] sm:$0xf]
    %v40 = vld [vmem:[%s1 + $0x20] sm:$0xf]
    %v41 = vld [vmem:[%s1 + $0x24] sm:$0xf]
    %v42 = vld [vmem:[%s1 + $0x28] sm:$0xf]
    %v43 = vld [vmem:[%s1 + $0x2c] sm:$0xf]
    %v44 = vld [vmem:[%s1 + $0x30] sm:$0xf]
    %v45 = vld [vmem:[%s1 + $0x34] sm:$0xf]
    %v46 = vld [vmem:[%s1 + $0x38] sm:$0xf]
    %v47 = vld [vmem:[%s1 + $0x3c] sm:$0xf]
    %v48 = vld [vmem:[%s1 + $0x40] sm:$0xf]
    %v49 = vld [vmem:[%s1 + $0x44] sm:$0xf]
    %v50 = vld [vmem:[%s1 + $0x48] sm:$0xf]
    %v51 = vld [vmem:[%s1 + $0x4c] sm:$0xf]
    %v52 = vld [vmem:[%s2] sm:$0xff]
    %v53 = vlaneseq
    %v54 = vshrl.u32 %v53, 7
    %v55 = vsub.s32 0, %v54
    %v56 = vrot.slane %v52, %v55
    %v73 = vunpack.c.l.b16 %v16
    %v74 = vunpack.c.h.b16 %v16
    %v75 = vunpack.c.l.b16 %v17
    %v76 = vunpack.c.h.b16 %v17
    %v77 = vunpack.c.l.b16 %v18
    %v78 = vunpack.c.h.b16 %v18
    %v79 = vunpack.c.l.b16 %v19
    %v80 = vunpack.c.h.b16 %v19
    %v81 = vunpack.c.l.b16 %v20
    %v82 = vunpack.c.h.b16 %v20
    %v83 = vunpack.c.l.b16 %v21
    %v84 = vunpack.c.h.b16 %v21
    %v85 = vunpack.c.l.b16 %v22
    %v86 = vunpack.c.h.b16 %v22
    %v87 = vunpack.c.l.b16 %v23
    %v88 = vunpack.c.h.b16 %v23
    %v89 = vunpack.c.l.b16 %v24
    %v90 = vunpack.c.h.b16 %v24
    %v91 = vunpack.c.l.b16 %v25
    %v92 = vunpack.c.h.b16 %v25
    %v93 = vunpack.c.l.b16 %v26
    %v94 = vunpack.c.h.b16 %v26
    %v95 = vunpack.c.l.b16 %v27
    %v96 = vunpack.c.h.b16 %v27
    %v97 = vunpack.c.l.b16 %v28
    %v98 = vunpack.c.h.b16 %v28
    %v99 = vunpack.c.l.b16 %v29
    %v100 = vunpack.c.h.b16 %v29
    %v101 = vunpack.c.l.b16 %v30
    %v102 = vunpack.c.h.b16 %v30
    %v103 = vunpack.c.l.b16 %v31
    %v104 = vunpack.c.h.b16 %v31
    %v105 = vpack.c.b16 %v75, %v73
    %v106 = vpack.c.b16 %v76, %v74
    %v107 = vpack.c.b16 %v79, %v77
    %v108 = vpack.c.b16 %v80, %v78
    %v109 = vpack.c.b16 %v83, %v81
    %v110 = vpack.c.b16 %v84, %v82
    %v111 = vpack.c.b16 %v87, %v85
    %v112 = vpack.c.b16 %v88, %v86
    %v113 = vpack.c.b16 %v91, %v89
    %v114 = vpack.c.b16 %v92, %v90
    %v115 = vpack.c.b16 %v95, %v93
    %v116 = vpack.c.b16 %v96, %v94
    %v117 = vpack.c.b16 %v99, %v97
    %v118 = vpack.c.b16 %v100, %v98
    %v119 = vpack.c.b16 %v103, %v101
    %v120 = vpack.c.b16 %v104, %v102
    %v149 = vunpack.c.l.b16 %v32
    %v150 = vunpack.c.l.b16 %v33
    %v151 = vunpack.c.l.b16 %v34
    %v152 = vunpack.c.l.b16 %v35
    %v153 = vunpack.c.l.b16 %v36
    %v154 = vunpack.c.l.b16 %v37
    %v155 = vunpack.c.l.b16 %v38
    %v156 = vunpack.c.l.b16 %v39
    %v157 = vunpack.c.l.b16 %v40
    %v158 = vunpack.c.l.b16 %v41
    %v159 = vunpack.c.l.b16 %v42
    %v160 = vunpack.c.l.b16 %v43
    %v161 = vunpack.c.l.b16 %v44
    %v162 = vunpack.c.l.b16 %v45
    %v163 = vunpack.c.l.b16 %v46
    %v164 = vunpack.c.l.b16 %v47
    %v165 = vunpack.c.l.b16 %v48
    %v166 = vunpack.c.l.b16 %v49
    %v167 = vunpack.c.l.b16 %v50
    %v168 = vunpack.c.l.b16 %v51
    %v169 = vpack.c.b16 %v150, %v149
    %v170 = vpack.c.b16 %v152, %v151
    %v171 = vpack.c.b16 %v154, %v153
    %v172 = vpack.c.b16 %v156, %v155
    %v173 = vpack.c.b16 %v158, %v157
    %v174 = vpack.c.b16 %v160, %v159
    %v175 = vpack.c.b16 %v162, %v161
    %v176 = vpack.c.b16 %v164, %v163
    %v177 = vpack.c.b16 %v166, %v165
    %v178 = vpack.c.b16 %v168, %v167
    %vm189 = vcmask 261120
    %v191 = vsel %vm189, %v106, 0
    %v194 = vsel %vm189, %v108, 0
    %v197 = vsel %vm189, %v110, 0
    %v200 = vsel %vm189, %v112, 0
    %v203 = vsel %vm189, %v114, 0
    %v206 = vsel %vm189, %v116, 0
    %v209 = vsel %vm189, %v118, 0
    %v212 = vsel %vm189, %v120, 0
    %214 = vmatprep.subr.bf16.mxu0 0
    %215 = vmatpush1.bf16.msra.mxu0 %v169
    %216 = vmatprep.subr.bf16.mxu0 0
    %217 = vmatpush1.bf16.msra.mxu0 %v170
    %218 = vmatprep.subr.bf16.mxu0 0
    %219 = vmatpush1.bf16.msra.mxu0 %v171
    %220 = vmatprep.subr.bf16.mxu0 0
    %221 = vmatpush1.bf16.msra.mxu0 %v172
    %222 = vmatprep.subr.bf16.mxu0 0
    %223 = vmatpush1.bf16.msra.mxu0 %v173
    %224 = vmatprep.subr.bf16.mxu0 0
    %225 = vmatpush1.bf16.msra.mxu0 %v174
    %226 = vmatprep.subr.bf16.mxu0 0
    %227 = vmatpush1.bf16.msra.mxu0 %v175
    %228 = vmatprep.subr.bf16.mxu0 0
    %229 = vmatpush1.bf16.msra.mxu0 %v176
    %230 = vmatprep.subr.bf16.mxu0 0
    %231 = vmatpush1.bf16.msra.mxu0 %v177
    %232 = vmatprep.subr.bf16.mxu0 0
    %233 = vmatpush1.bf16.msra.mxu0 %v178
    %234 = vmatprep.subr.bf16.mxu0 0
    %235 = vmatpush1.bf16.msra.mxu0 0
    %236 = vmatprep.subr.bf16.mxu0 0
    %237 = vmatpush1.bf16.msra.mxu0 0
    %238 = vmatprep.subr.bf16.mxu0 0
    %239 = vmatpush1.bf16.msra.mxu0 0
    %240 = vmatprep.subr.bf16.mxu0 0
    %241 = vmatpush1.bf16.msra.mxu0 0
    %242 = vmatprep.subr.bf16.mxu0 0
    %243 = vmatpush1.bf16.msra.mxu0 0
    %244 = vmatprep.subr.bf16.mxu0 0
    %245 = vmatpush1.bf16.msra.mxu0 0
    %246 = vmatprep.mubr.bf16.mxu0 %v191
    %247 = vmatmul.mubr.bf16.gmra.mrb[0].mxu0 %v105
    %v248 = vpop.f32.mrb[0].mxu0
    %v249 = vadd.f32 %v56, %v248
    %v250 = vpop.f32.mrb[0].mxu0
    %v251 = vpop.f32.mrb[0].mxu0
    %v252 = vadd.f32 %v56, %v251
    %v253 = vpop.f32.mrb[0].mxu0
    %254 = vmatprep.mubr.bf16.mxu0 %v194
    %255 = vmatmul.mubr.bf16.gmra.mrb[0].mxu0 %v107
    %v256 = vpop.f32.mrb[0].mxu0
    %v257 = vadd.f32 %v56, %v256
    %v258 = vpop.f32.mrb[0].mxu0
    %v259 = vpop.f32.mrb[0].mxu0
    %v260 = vadd.f32 %v56, %v259
    %v261 = vpop.f32.mrb[0].mxu0
    %262 = vmatprep.mubr.bf16.mxu0 %v197
    %263 = vmatmul.mubr.bf16.gmra.mrb[0].mxu0 %v109
    %v264 = vpop.f32.mrb[0].mxu0
    %v265 = vadd.f32 %v56, %v264
    %v266 = vpop.f32.mrb[0].mxu0
    %v267 = vpop.f32.mrb[0].mxu0
    %v268 = vadd.f32 %v56, %v267
    %v269 = vpop.f32.mrb[0].mxu0
    %270 = vmatprep.mubr.bf16.mxu0 %v200
    %271 = vmatmul.mubr.bf16.gmra.mrb[0].mxu0 %v111
    %v272 = vpop.f32.mrb[0].mxu0
    %v273 = vadd.f32 %v56, %v272
    %v274 = vpop.f32.mrb[0].mxu0
    %v275 = vpop.f32.mrb[0].mxu0
    %v276 = vadd.f32 %v56, %v275
    %v277 = vpop.f32.mrb[0].mxu0
    %278 = vmatprep.mubr.bf16.mxu0 %v203
    %279 = vmatmul.mubr.bf16.gmra.mrb[0].mxu0 %v113
    %v280 = vpop.f32.mrb[0].mxu0
    %v281 = vadd.f32 %v56, %v280
    %v282 = vpop.f32.mrb[0].mxu0
    %v283 = vpop.f32.mrb[0].mxu0
    %v284 = vadd.f32 %v56, %v283
    %v285 = vpop.f32.mrb[0].mxu0
    %286 = vmatprep.mubr.bf16.mxu0 %v206
    %287 = vmatmul.mubr.bf16.gmra.mrb[0].mxu0 %v115
    %v288 = vpop.f32.mrb[0].mxu0
    %v289 = vadd.f32 %v56, %v288
    %v290 = vpop.f32.mrb[0].mxu0
    %v291 = vpop.f32.mrb[0].mxu0
    %v292 = vadd.f32 %v56, %v291
    %v293 = vpop.f32.mrb[0].mxu0
    %294 = vmatprep.mubr.bf16.mxu0 %v209
    %295 = vmatmul.mubr.bf16.gmra.mrb[0].mxu0 %v117
    %v296 = vpop.f32.mrb[0].mxu0
    %v297 = vadd.f32 %v56, %v296
    %v298 = vpop.f32.mrb[0].mxu0
    %v299 = vpop.f32.mrb[0].mxu0
    %v300 = vadd.f32 %v56, %v299
    %v301 = vpop.f32.mrb[0].mxu0
    %302 = vmatprep.mubr.bf16.mxu0 %v212
    %303 = vmatmul.mubr.bf16.gmra.mrb[0].mxu0 %v119
    %v304 = vpop.f32.mrb[0].mxu0
    %v305 = vadd.f32 %v56, %v304
    %v306 = vpop.f32.mrb[0].mxu0
    %v307 = vpop.f32.mrb[0].mxu0
    %v308 = vadd.f32 %v56, %v307
    %v309 = vpop.f32.mrb[0].mxu0
    %310 = vdwg.mxu0
    %311 = vadd.xlane.f32.xlu0 %v249
    %v312 = vpop.xlane.xlu0 %311
    %313 = vadd.xlane.f32.xlu0 %v252
    %v314 = vpop.xlane.xlu0 %313
    %315 = vadd.xlane.f32.xlu0 %v257
    %v316 = vpop.xlane.xlu0 %315
    %317 = vadd.xlane.f32.xlu0 %v260
    %v318 = vpop.xlane.xlu0 %317
    %319 = vadd.xlane.f32.xlu0 %v265
    %v320 = vpop.xlane.xlu0 %319
    %321 = vadd.xlane.f32.xlu0 %v268
    %v322 = vpop.xlane.xlu0 %321
    %323 = vadd.xlane.f32.xlu0 %v273
    %v324 = vpop.xlane.xlu0 %323
    %325 = vadd.xlane.f32.xlu0 %v276
    %v326 = vpop.xlane.xlu0 %325
    %327 = vadd.xlane.f32.xlu0 %v281
    %v328 = vpop.xlane.xlu0 %327
    %329 = vadd.xlane.f32.xlu0 %v284
    %v330 = vpop.xlane.xlu0 %329
    %331 = vadd.xlane.f32.xlu0 %v289
    %v332 = vpop.xlane.xlu0 %331
    %333 = vadd.xlane.f32.xlu0 %v292
    %v334 = vpop.xlane.xlu0 %333
    %335 = vadd.xlane.f32.xlu0 %v297
    %v336 = vpop.xlane.xlu0 %335
    %337 = vadd.xlane.f32.xlu0 %v300
    %v338 = vpop.xlane.xlu0 %337
    %339 = vadd.xlane.f32.xlu0 %v305
    %v340 = vpop.xlane.xlu0 %339
    %341 = vadd.xlane.f32.xlu0 %v308
    %v342 = vpop.xlane.xlu0 %341
    %v343 = vrcp.pop 128.0
    %v344 = vmul.f32 %v312, %v343
    %v345 = vmul.f32 %v314, %v343
    %v346 = vmul.f32 %v316, %v343
    %v347 = vmul.f32 %v318, %v343
    %v348 = vmul.f32 %v320, %v343
    %v349 = vmul.f32 %v322, %v343
    %v350 = vmul.f32 %v324, %v343
    %v351 = vmul.f32 %v326, %v343
    %v352 = vmul.f32 %v328, %v343
    %v353 = vmul.f32 %v330, %v343
    %v354 = vmul.f32 %v332, %v343
    %v355 = vmul.f32 %v334, %v343
    %v356 = vmul.f32 %v336, %v343
    %v357 = vmul.f32 %v338, %v343
    %v358 = vmul.f32 %v340, %v343
    %v359 = vmul.f32 %v342, %v343
    %v360 = vsub.f32 %v249, %v344
    %v361 = vsub.f32 %v252, %v345
    %v362 = vsub.f32 %v257, %v346
    %v363 = vsub.f32 %v260, %v347
    %v364 = vsub.f32 %v265, %v348
    %v365 = vsub.f32 %v268, %v349
    %v366 = vsub.f32 %v273, %v350
    %v367 = vsub.f32 %v276, %v351
    %v368 = vsub.f32 %v281, %v352
    %v369 = vsub.f32 %v284, %v353
    %v370 = vsub.f32 %v289, %v354
    %v371 = vsub.f32 %v292, %v355
    %v372 = vsub.f32 %v297, %v356
    %v373 = vsub.f32 %v300, %v357
    %v374 = vsub.f32 %v305, %v358
    %v375 = vsub.f32 %v308, %v359
    %v376 = vmul.f32 %v360, %v360
    %v377 = vmul.f32 %v361, %v361
    %v378 = vmul.f32 %v362, %v362
    %v379 = vmul.f32 %v363, %v363
    %v380 = vmul.f32 %v364, %v364
    %v381 = vmul.f32 %v365, %v365
    %v382 = vmul.f32 %v366, %v366
    %v383 = vmul.f32 %v367, %v367
    %v384 = vmul.f32 %v368, %v368
    %v385 = vmul.f32 %v369, %v369
    %v386 = vmul.f32 %v370, %v370
    %v387 = vmul.f32 %v371, %v371
    %v388 = vmul.f32 %v372, %v372
    %v389 = vmul.f32 %v373, %v373
    %v390 = vmul.f32 %v374, %v374
    %v391 = vmul.f32 %v375, %v375
    %392 = vadd.xlane.f32.xlu0 %v376
    %v393 = vpop.xlane.xlu0 %392
    %394 = vadd.xlane.f32.xlu0 %v377
    %v395 = vpop.xlane.xlu0 %394
    %396 = vadd.xlane.f32.xlu0 %v378
    %v397 = vpop.xlane.xlu0 %396
    %398 = vadd.xlane.f32.xlu0 %v379
    %v399 = vpop.xlane.xlu0 %398
    %400 = vadd.xlane.f32.xlu0 %v380
    %v401 = vpop.xlane.xlu0 %400
    %402 = vadd.xlane.f32.xlu0 %v381
    %v403 = vpop.xlane.xlu0 %402
    %404 = vadd.xlane.f32.xlu0 %v382
    %v405 = vpop.xlane.xlu0 %404
    %406 = vadd.xlane.f32.xlu0 %v383
    %v407 = vpop.xlane.xlu0 %406
    %408 = vadd.xlane.f32.xlu0 %v384
    %v409 = vpop.xlane.xlu0 %408
    %410 = vadd.xlane.f32.xlu0 %v385
    %v411 = vpop.xlane.xlu0 %410
    %412 = vadd.xlane.f32.xlu0 %v386
    %v413 = vpop.xlane.xlu0 %412
    %414 = vadd.xlane.f32.xlu0 %v387
    %v415 = vpop.xlane.xlu0 %414
    %416 = vadd.xlane.f32.xlu0 %v388
    %v417 = vpop.xlane.xlu0 %416
    %418 = vadd.xlane.f32.xlu0 %v389
    %v419 = vpop.xlane.xlu0 %418
    %420 = vadd.xlane.f32.xlu0 %v390
    %v421 = vpop.xlane.xlu0 %420
    %422 = vadd.xlane.f32.xlu0 %v391
    %v423 = vpop.xlane.xlu0 %422
    %v424 = vmul.f32 %v393, %v343
    %v425 = vmul.f32 %v395, %v343
    %v426 = vmul.f32 %v397, %v343
    %v427 = vmul.f32 %v399, %v343
    %v428 = vmul.f32 %v401, %v343
    %v429 = vmul.f32 %v403, %v343
    %v430 = vmul.f32 %v405, %v343
    %v431 = vmul.f32 %v407, %v343
    %v432 = vmul.f32 %v409, %v343
    %v433 = vmul.f32 %v411, %v343
    %v434 = vmul.f32 %v413, %v343
    %v435 = vmul.f32 %v415, %v343
    %v436 = vmul.f32 %v417, %v343
    %v437 = vmul.f32 %v419, %v343
    %v438 = vmul.f32 %v421, %v343
    %v439 = vmul.f32 %v423, %v343
    %v440 = vadd.f32 %v424, 1e-05
    %v441 = vadd.f32 %v425, 1e-05
    %v442 = vadd.f32 %v426, 1e-05
    %v443 = vadd.f32 %v427, 1e-05
    %v444 = vadd.f32 %v428, 1e-05
    %v445 = vadd.f32 %v429, 1e-05
    %v446 = vadd.f32 %v430, 1e-05
    %v447 = vadd.f32 %v431, 1e-05
    %v448 = vadd.f32 %v432, 1e-05
    %v449 = vadd.f32 %v433, 1e-05
    %v450 = vadd.f32 %v434, 1e-05
    %v451 = vadd.f32 %v435, 1e-05
    %v452 = vadd.f32 %v436, 1e-05
    %v453 = vadd.f32 %v437, 1e-05
    %v454 = vadd.f32 %v438, 1e-05
    %v455 = vadd.f32 %v439, 1e-05
    %v456 = vrsqrt.pop %v440
    %v457 = vrsqrt.pop %v441
    %v458 = vrsqrt.pop %v442
    %v459 = vrsqrt.pop %v443
    %v460 = vrsqrt.pop %v444
    %v461 = vrsqrt.pop %v445
    %v462 = vrsqrt.pop %v446
    %v463 = vrsqrt.pop %v447
    %v464 = vrsqrt.pop %v448
    %v465 = vrsqrt.pop %v449
    %v466 = vrsqrt.pop %v450
    %v467 = vrsqrt.pop %v451
    %v468 = vrsqrt.pop %v452
    %v469 = vrsqrt.pop %v453
    %v470 = vrsqrt.pop %v454
    %v471 = vrsqrt.pop %v455
    %v472 = vmul.f32 %v360, %v456
    %v473 = vmul.f32 %v361, %v457
    %v474 = vmul.f32 %v362, %v458
    %v475 = vmul.f32 %v363, %v459
    %v476 = vmul.f32 %v364, %v460
    %v477 = vmul.f32 %v365, %v461
    %v478 = vmul.f32 %v366, %v462
    %v479 = vmul.f32 %v367, %v463
    %v480 = vmul.f32 %v368, %v464
    %v481 = vmul.f32 %v369, %v465
    %v482 = vmul.f32 %v370, %v466
    %v483 = vmul.f32 %v371, %v467
    %v484 = vmul.f32 %v372, %v468
    %v485 = vmul.f32 %v373, %v469
    %v486 = vmul.f32 %v374, %v470
    %v487 = vmul.f32 %v375, %v471
    %v488 = vlaneseq
    %v489 = vshrl.u32 %v488, 7
    %v490 = vsub.s32 1, %v489
    %v491 = vrot.slane %v52, %v490
    %v492 = vmul.f32 %v472, %v491
    %v493 = vmul.f32 %v473, %v491
    %v494 = vmul.f32 %v474, %v491
    %v495 = vmul.f32 %v475, %v491
    %v496 = vmul.f32 %v476, %v491
    %v497 = vmul.f32 %v477, %v491
    %v498 = vmul.f32 %v478, %v491
    %v499 = vmul.f32 %v479, %v491
    %v500 = vmul.f32 %v480, %v491
    %v501 = vmul.f32 %v481, %v491
    %v502 = vmul.f32 %v482, %v491
    %v503 = vmul.f32 %v483, %v491
    %v504 = vmul.f32 %v484, %v491
    %v505 = vmul.f32 %v485, %v491
    %v506 = vmul.f32 %v486, %v491
    %v507 = vmul.f32 %v487, %v491
    %v508 = vlaneseq
    %v509 = vshrl.u32 %v508, 7
    %v510 = vsub.s32 2, %v509
    %v511 = vrot.slane %v52, %v510
    %v512 = vadd.f32 %v492, %v511
    %v513 = vadd.f32 %v493, %v511
    %v514 = vadd.f32 %v494, %v511
    %v515 = vadd.f32 %v495, %v511
    %v516 = vadd.f32 %v496, %v511
    %v517 = vadd.f32 %v497, %v511
    %v518 = vadd.f32 %v498, %v511
    %v519 = vadd.f32 %v499, %v511
    %v520 = vadd.f32 %v500, %v511
    %v521 = vadd.f32 %v501, %v511
    %v522 = vadd.f32 %v502, %v511
    %v523 = vadd.f32 %v503, %v511
    %v524 = vadd.f32 %v504, %v511
    %v525 = vadd.f32 %v505, %v511
    %v526 = vadd.f32 %v506, %v511
    %v527 = vadd.f32 %v507, %v511
    %528 = vst [vmem:[#allocation2] sm:$0xff] %v512
    %529 = vst [vmem:[#allocation2 + $0x8] sm:$0xff] %v513
    %530 = vst [vmem:[#allocation2 + $0x10] sm:$0xff] %v514
    %531 = vst [vmem:[#allocation2 + $0x18] sm:$0xff] %v515
    %532 = vst [vmem:[#allocation2 + $0x20] sm:$0xff] %v516
    %533 = vst [vmem:[#allocation2 + $0x28] sm:$0xff] %v517
    %534 = vst [vmem:[#allocation2 + $0x30] sm:$0xff] %v518
    %535 = vst [vmem:[#allocation2 + $0x38] sm:$0xff] %v519
    %536 = vst [vmem:[#allocation2 + $0x40] sm:$0xff] %v520
    %537 = vst [vmem:[#allocation2 + $0x48] sm:$0xff] %v521
    %538 = vst [vmem:[#allocation2 + $0x50] sm:$0xff] %v522
    %539 = vst [vmem:[#allocation2 + $0x58] sm:$0xff] %v523
    %540 = vst [vmem:[#allocation2 + $0x60] sm:$0xff] %v524
    %541 = vst [vmem:[#allocation2 + $0x68] sm:$0xff] %v525
    %542 = vst [vmem:[#allocation2 + $0x70] sm:$0xff] %v526
    %543 = vst [vmem:[#allocation2 + $0x78] sm:$0xff] %v527
    // Predicated region
    $region14: #{tpu_custom_call.1} parent=1 // pred_check
      _
    $region15: #{tpu_custom_call.1} parent=1 // pred_check_branch
      %545 = sbr.rel (0) target = $region17
    $region16: #{tpu_custom_call.1} parent=1 // pred_region
      %s547 = ssub.s32 2048, 2048
      %548 = vsyncadd [#allocation3], %s547
      %s549 = sshll.u32 [#allocation2], 4
      %s550 = int_to_ptr.vmem [resolvable:$true] %s549
      %555 = dma.vmem_to_hbm [thread:$0]  %s550, 2048, %s3, [#allocation3], 128, 128, 8
    $region17: #{tpu_custom_call.1} parent=1 // pred_fallthru
      _
    // Predicated region
    $region18: #{tpu_custom_call.1} parent=1 // pred_check
      _
    $region19: #{tpu_custom_call.1} parent=1 // pred_check_branch
      %557 = sbr.rel (0) target = $region21
    $region20: #{tpu_custom_call.1} parent=1 // pred_region
      %558 = dma.done [#allocation3], 2048
    $region21: #{tpu_custom_call.1} parent=1 // pred_fallthru
      _
    %559 = vsyncpa [#allocation3], 1

</llo_original>
